<compile_context>
chip_gen: v6e
topology: v6e:2x2x1
jax: 0.10.0
libtpu: 0.0.40
codegen_flags: <defaults>
</compile_context>

<pallas_src>
import functools
from typing import NamedTuple

import jax
import jax.numpy as jnp
from jax.experimental import pallas as pl
from jax.experimental.pallas import tpu as pltpu

HIDDEN = 128      # fc1 output width (fixed by the module)
OUT_PAD = 128     # lane-dense padded action dimension
NEG_BIG = -1e30   # f32 bias for padded action columns -> softmax prob exactly 0
SUB = 16          # sublane multiple (bf16 packs 16 rows per vreg tile)
MAX_TB = 2048     # cap on batch-tile rows (out tile ~1 MiB, VMEM-safe everywhere)


def _round_up(x, m):
    return ((x + m - 1) // m) * m


def _num_tensorcores():
    """2 on v7x (2 TCs / chip), 1 elsewhere (v5e / v6e / unknown)."""
    try:
        kind = jax.devices()[0].device_kind.lower()
    except Exception:
        return 1
    return 2 if ("v7" in kind or "tpu7" in kind) else 1


class PackedPolicy(NamedTuple):
    w1p: jax.Array   # (pad_in, HIDDEN)  bf16, zero-padded rows
    b1p: jax.Array   # (1, HIDDEN)       f32
    w2p: jax.Array   # (HIDDEN, OUT_PAD) bf16, zero-padded action columns
    b2p: jax.Array   # (1, OUT_PAD)      f32, padded action columns = -1e30
    in_dim: int
    out_dim: int


def pack_params(w1, b1, w2, b2):
    """One-time packing of (w1, b1, w2, b2) into kernel-friendly blocks."""
    in_dim, hidden = w1.shape
    out_dim = w2.shape[1]
    assert hidden == HIDDEN and out_dim <= OUT_PAD
    pad_in = _round_up(max(in_dim, 1), SUB)

    w1p = jnp.zeros((pad_in, HIDDEN), jnp.bfloat16)
    w1p = w1p.at[:in_dim, :].set(w1.astype(jnp.bfloat16))
    b1p = b1.astype(jnp.float32).reshape(1, HIDDEN)

    w2p = jnp.zeros((HIDDEN, OUT_PAD), jnp.bfloat16)
    w2p = w2p.at[:, :out_dim].set(w2.astype(jnp.bfloat16))
    b2p = jnp.full((1, OUT_PAD), NEG_BIG, jnp.float32)
    b2p = b2p.at[0, :out_dim].set(b2.astype(jnp.float32))

    return PackedPolicy(w1p, b1p, w2p, b2p, int(in_dim), int(out_dim))


def policy_forward_kernel(x_ref, w1_ref, b1_ref, w2_ref, b2_ref, o_ref):
    # x_ref : (TB, pad_in)       bf16 batch tile (features zero-padded)
    # w1_ref: (pad_in, HIDDEN)   bf16   b1_ref: (1, HIDDEN)   f32
    # w2_ref: (HIDDEN, OUT_PAD)  bf16   b2_ref: (1, OUT_PAD)  f32 (-1e30 pad)
    # o_ref : (TB, OUT_PAD)      f32 lane-dense probabilities
    x = x_ref[...]

    # fc1 + bias + ReLU (bf16 MXU, f32 accumulate, f32 bias)
    h = jnp.dot(x, w1_ref[...], preferred_element_type=jnp.float32) + b1_ref[...]
    h = jnp.maximum(h, 0.0)

    # fc2 (padded action columns get logit -1e30 via the f32 b2 padding)
    logits = jnp.dot(h.astype(jnp.bfloat16), w2_ref[...],
                     preferred_element_type=jnp.float32) + b2_ref[...]

    # softmax over the action axis (== torch softmax(dim=0) on a 1-D output)
    m = jnp.max(logits, axis=-1, keepdims=True)
    e = jnp.exp(logits - m)
    o_ref[...] = e / jnp.sum(e, axis=-1, keepdims=True)   # exact division


@functools.partial(
    jax.jit,
    static_argnames=("in_dim", "out_dim", "tb", "n_blocks", "squeeze"))
def _forward_impl(x2, w1p, b1p, w2p, b2p, *, in_dim, out_dim, tb, n_blocks,
                  squeeze):
    B = x2.shape[0]
    pad_in = w1p.shape[0]
    B_pad = tb * n_blocks

    # Pad batch rows and feature columns; cast to bf16 (fuses under jit).
    x_p = jnp.pad(x2.astype(jnp.bfloat16),
                  ((0, B_pad - B), (0, pad_in - in_dim)))

    cost = pl.CostEstimate(
        flops=2 * B_pad * (pad_in * HIDDEN + HIDDEN * OUT_PAD),
        transcendentals=B_pad * OUT_PAD,
        bytes_accessed=(x_p.size * 2 + w1p.size * 2 + w2p.size * 2
                        + b1p.size * 4 + b2p.size * 4 + B_pad * OUT_PAD * 4),
    )

    out = pl.pallas_call(
        policy_forward_kernel,
        out_shape=jax.ShapeDtypeStruct((B_pad, OUT_PAD), jnp.float32),
        grid_spec=pltpu.PrefetchScalarGridSpec(
            num_scalar_prefetch=0,
            grid=(n_blocks,),
            in_specs=[
                pl.BlockSpec((tb, pad_in), lambda i: (i, 0)),
                # Parameters: constant index_map -> fetched once, resident.
                pl.BlockSpec((pad_in, HIDDEN), lambda i: (0, 0)),
                pl.BlockSpec((1, HIDDEN), lambda i: (0, 0)),
                pl.BlockSpec((HIDDEN, OUT_PAD), lambda i: (0, 0)),
                pl.BlockSpec((1, OUT_PAD), lambda i: (0, 0)),
            ],
            out_specs=pl.BlockSpec((tb, OUT_PAD), lambda i: (i, 0)),
        ),
        compiler_params=pltpu.CompilerParams(
            dimension_semantics=("parallel",)),
        cost_estimate=cost,
    )(x_p, w1p, b1p, w2p, b2p)

    probs = out[:B, :out_dim]
    return probs[0] if squeeze else probs


def make_policy_forward(w1, b1, w2, b2, *, max_block_rows=MAX_TB):
    """Pack parameters once and return a jitted forward(x) -> probs callable."""
    packed = pack_params(w1, b1, w2, b2)
    n_cores = _num_tensorcores()

    def forward(x):
        squeeze = (x.ndim == 1)
        x2 = x[None, :] if squeeze else x
        B = x2.shape[0]
        B_min = _round_up(B, SUB)
        # 1 block on single-TC chips, 2 on v7x (one per TensorCore), unless the
        # batch is too small to split; cap block rows for very large batches.
        nb = n_cores if B_min >= SUB * n_cores else 1
        tb = min(max_block_rows, _round_up(-(-B_min // nb), SUB))
        nb = -(-B_min // tb)
        return _forward_impl(
            x2, packed.w1p, packed.b1p, packed.w2p, packed.b2p,
            in_dim=packed.in_dim, out_dim=packed.out_dim,
            tb=int(tb), n_blocks=int(nb), squeeze=squeeze)

    return forward


def init_params(key, in_dim, hidden, out_dim):
    # Deterministic init mimicking nn.Linear's uniform(-1/sqrt(fan_in), ...).
    k1, k2, k3, k4 = jax.random.split(key, 4)
    bound1 = 1.0 / jnp.sqrt(in_dim)
    bound2 = 1.0 / jnp.sqrt(hidden)
    # Stored already transposed: (in_features, out_features).
    w1 = jax.random.uniform(k1, (in_dim, hidden), jnp.float32, -bound1, bound1)
    b1 = jax.random.uniform(k2, (hidden,), jnp.float32, -bound1, bound1)
    w2 = jax.random.uniform(k3, (hidden, out_dim), jnp.float32, -bound2, bound2)
    b2 = jax.random.uniform(k4, (out_dim,), jnp.float32, -bound2, bound2)
    return w1, b1, w2, b2


def _reference(x2, w1, b1, w2, b2):
    h = jnp.maximum(x2 @ w1 + b1, 0.0)
    return jax.nn.softmax(h @ w2 + b2, axis=-1)


if __name__ == "__main__":
    in_dim, hidden, out_dim = 4, 128, 2   # CartPole-style REINFORCE policy
    B = 256                               # batched rollout of states

    key = jax.random.PRNGKey(0)
    kx, ks, kp = jax.random.split(key, 3)
    xb = jax.random.normal(kx, (B, in_dim), jnp.float32)
    xs = jax.random.normal(ks, (in_dim,), jnp.float32)
    w1, b1, w2, b2 = init_params(kp, in_dim, hidden, out_dim)

    forward = make_policy_forward(w1, b1, w2, b2)   # packs params once

    # Batched path (1 grid step on v5e/v6e, 2 parallel steps on v7x).
    probs_b = jax.block_until_ready(forward(xb))
    ref_b = _reference(xb, w1, b1, w2, b2)
    assert probs_b.shape == (B, out_dim)
    assert jnp.allclose(probs_b, ref_b, atol=1e-2), (probs_b[:2], ref_b[:2])
    assert jnp.allclose(jnp.sum(probs_b, axis=-1), 1.0, atol=1e-3)

    # Single-state path, matching the original module's 1-D forward
    # (softmax(dim=0) on the 1-D output == softmax over the action axis).
    probs_s = jax.block_until_ready(forward(xs))
    ref_s = _reference(xs.reshape(1, -1), w1, b1, w2, b2)[0]
    assert probs_s.shape == (out_dim,)
    assert jnp.allclose(probs_s, ref_s, atol=1e-2), (probs_s, ref_s)
    assert jnp.allclose(jnp.sum(probs_s), 1.0, atol=1e-3)

    print("KERNEL_OK")
</pallas_src>

<mosaic_0001>
module attributes {stable_mosaic.version = 11 : i64} {
  func.func @policy_forward_kernel(%arg0: i32, %arg1: memref<256x16xbf16, #tpu.memory_space<vmem>>, %arg2: memref<16x128xbf16, #tpu.memory_space<vmem>>, %arg3: memref<1x128xf32, #tpu.memory_space<vmem>>, %arg4: memref<128x128xbf16, #tpu.memory_space<vmem>>, %arg5: memref<1x128xf32, #tpu.memory_space<vmem>>, %arg6: memref<256x128xf32, #tpu.memory_space<vmem>>) attributes {dimension_semantics = [#tpu.dimension_semantics<parallel>], iteration_bounds = array<i64: 1>, scalar_prefetch = 0 : i64, scratch_operands = 0 : i64, tpu.core_type = #tpu.core_type<tc>, window_params = [{transform_indices = @transform_0, window_bounds = array<i64: 256, 16>}, {pipeline_mode = #tpu.pipeline_mode<synchronous>, transform_indices = @transform_1, window_bounds = array<i64: 16, 128>}, {pipeline_mode = #tpu.pipeline_mode<synchronous>, transform_indices = @transform_2, window_bounds = array<i64: 1, 128>}, {pipeline_mode = #tpu.pipeline_mode<synchronous>, transform_indices = @transform_3, window_bounds = array<i64: 128, 128>}, {pipeline_mode = #tpu.pipeline_mode<synchronous>, transform_indices = @transform_4, window_bounds = array<i64: 1, 128>}, {transform_indices = @transform_5, window_bounds = array<i64: 256, 128>}]} {
    %c0 = arith.constant 0 : index
    %c0_0 = arith.constant 0 : index
    %0 = vector.load %arg1[%c0, %c0_0] : memref<256x16xbf16, #tpu.memory_space<vmem>>, vector<256x16xbf16>
    %c0_1 = arith.constant 0 : index
    %c0_2 = arith.constant 0 : index
    %1 = vector.load %arg2[%c0_1, %c0_2] : memref<16x128xbf16, #tpu.memory_space<vmem>>, vector<16x128xbf16>
    %cst = arith.constant dense<0.000000e+00> : vector<256x128xf32>
    %2 = tpu.matmul %0, %1, %cst {dimension_numbers = #tpu.dot_dimension_numbers<[1], [0], [0], [1], [0, 0, 1, 1], [], []>} : vector<256x16xbf16>, vector<16x128xbf16>, vector<256x128xf32> -> vector<256x128xf32>
    %c0_3 = arith.constant 0 : index
    %c0_4 = arith.constant 0 : index
    %3 = vector.load %arg3[%c0_3, %c0_4] : memref<1x128xf32, #tpu.memory_space<vmem>>, vector<1x128xf32>
    %4 = vector.broadcast %3 : vector<1x128xf32> to vector<256x128xf32>
    %5 = arith.addf %2, %4 : vector<256x128xf32>
    %cst_5 = arith.constant 0.000000e+00 : f32
    %6 = vector.broadcast %cst_5 : f32 to vector<256x128xf32>
    %7 = arith.maximumf %5, %6 : vector<256x128xf32>
    %8 = arith.truncf %7 : vector<256x128xf32> to vector<256x128xbf16>
    %c0_6 = arith.constant 0 : index
    %c0_7 = arith.constant 0 : index
    %9 = vector.load %arg4[%c0_6, %c0_7] : memref<128x128xbf16, #tpu.memory_space<vmem>>, vector<128x128xbf16>
    %cst_8 = arith.constant dense<0.000000e+00> : vector<256x128xf32>
    %10 = tpu.matmul %8, %9, %cst_8 {dimension_numbers = #tpu.dot_dimension_numbers<[1], [0], [0], [1], [0, 0, 1, 1], [], []>} : vector<256x128xbf16>, vector<128x128xbf16>, vector<256x128xf32> -> vector<256x128xf32>
    %c0_9 = arith.constant 0 : index
    %c0_10 = arith.constant 0 : index
    %11 = vector.load %arg5[%c0_9, %c0_10] : memref<1x128xf32, #tpu.memory_space<vmem>>, vector<1x128xf32>
    %12 = vector.broadcast %11 : vector<1x128xf32> to vector<256x128xf32>
    %13 = arith.addf %10, %12 : vector<256x128xf32>
    %cst_11 = arith.constant dense<0xFF800000> : vector<256xf32>
    %14 = vector.multi_reduction <maximumf>, %13, %cst_11 [1] : vector<256x128xf32> to vector<256xf32>
    %15 = vector.shape_cast %14 : vector<256xf32> to vector<256x1xf32>
    %16 = vector.broadcast %15 : vector<256x1xf32> to vector<256x128xf32>
    %17 = arith.subf %13, %16 : vector<256x128xf32>
    %18 = math.exp %17 : vector<256x128xf32>
    %cst_12 = arith.constant dense<0.000000e+00> : vector<256xf32>
    %19 = vector.multi_reduction <add>, %18, %cst_12 [1] : vector<256x128xf32> to vector<256xf32>
    %20 = vector.shape_cast %19 : vector<256xf32> to vector<256x1xf32>
    %21 = vector.broadcast %20 : vector<256x1xf32> to vector<256x128xf32>
    %22 = arith.divf %18, %21 : vector<256x128xf32>
    %c0_13 = arith.constant 0 : index
    %c0_14 = arith.constant 0 : index
    %23 = vector.load %arg6[%c0_13, %c0_14] : memref<256x128xf32, #tpu.memory_space<vmem>>, vector<256x128xf32>
    tpu.vector_store %arg6[%c0_13, %c0_14], %22 {strides = array<i32>} : memref<256x128xf32, #tpu.memory_space<vmem>>, vector<256x128xf32>,
    return
  }
  func.func @transform_0(%arg0: i32) -> (i32, i32) {
    %c0_i32 = arith.constant 0 : i32
    %c0_i32_0 = arith.constant 0 : i32
    return %arg0, %c0_i32 : i32, i32
  }
  func.func @transform_1(%arg0: i32) -> (i32, i32) {
    %c0_i32 = arith.constant 0 : i32
    %c0_i32_0 = arith.constant 0 : i32
    %c0_i32_1 = arith.constant 0 : i32
    return %c0_i32, %c0_i32_0 : i32, i32
  }
  func.func @transform_2(%arg0: i32) -> (i32, i32) {
    %c0_i32 = arith.constant 0 : i32
    %c0_i32_0 = arith.constant 0 : i32
    %c0_i32_1 = arith.constant 0 : i32
    return %c0_i32, %c0_i32_0 : i32, i32
  }
  func.func @transform_3(%arg0: i32) -> (i32, i32) {
    %c0_i32 = arith.constant 0 : i32
    %c0_i32_0 = arith.constant 0 : i32
    %c0_i32_1 = arith.constant 0 : i32
    return %c0_i32, %c0_i32_0 : i32, i32
  }
  func.func @transform_4(%arg0: i32) -> (i32, i32) {
    %c0_i32 = arith.constant 0 : i32
    %c0_i32_0 = arith.constant 0 : i32
    %c0_i32_1 = arith.constant 0 : i32
    return %c0_i32, %c0_i32_0 : i32, i32
  }
  func.func @transform_5(%arg0: i32) -> (i32, i32) {
    %c0_i32 = arith.constant 0 : i32
    %c0_i32_0 = arith.constant 0 : i32
    return %arg0, %c0_i32 : i32, i32
  }
}

</mosaic_0001>

<llo_original>
// kernel: _forward_impl.1
$region0: #{_forward_impl.1}
  #allocation0 [shape = 'u32[]', space=smem, size = 0x4, offset = 0x4, fixed_abs, tag = 'smem constant byte address 0x4 - core index']
  #allocation1 [shape = 'u32[144,128]{1,0:T(1,128)}', space=vmem, size = 0x12000, scoped, tag = 'internal scratch']
  %s0 = inlined_call_operand.vmem [shape: bf16[256,16], index: 0, kind: input, shape index: {}]
  %s1 = inlined_call_operand.vmem [shape: bf16[16,128], index: 1, kind: input, shape index: {}]
  %s2 = inlined_call_operand.vmem [shape: f32[1,128], index: 2, kind: input, shape index: {}]
  %s3 = inlined_call_operand.vmem [shape: bf16[128,128], index: 3, kind: input, shape index: {}]
  %s4 = inlined_call_operand.vmem [shape: f32[1,128], index: 4, kind: input, shape index: {}]
  %s5 = inlined_call_operand.vmem [shape: f32[256,128], index: 5, kind: output, shape index: {}]
  %s6 = sld [smem:[#allocation0]]
  $region30: #{_forward_impl.1} parent=0
    _
  %s8 = ssub.s32 1, %s6
  %s9 = scalar_select 0, %s8, %s6
  // Predicated region
  $region2: #{_forward_impl.1} parent=0 // pred_check
    _
  $region3: #{_forward_impl.1} parent=0 // pred_check_branch
    %11 = sbr.rel (0) target = $region5
  $region4: #{_forward_impl.1} parent=0 // pred_region
    _
  $region5: #{_forward_impl.1} parent=0 // pred_fallthru
    _
  // Predicated region
  $region6: #{_forward_impl.1} parent=0 // pred_check
    _
  $region7: #{_forward_impl.1} parent=0 // pred_check_branch
    %13 = sbr.rel (0) target = $region9
  $region8: #{_forward_impl.1} parent=0 // pred_region
    _
  $region9: #{_forward_impl.1} parent=0 // pred_fallthru
    _
  // Predicated region
  $region10: #{_forward_impl.1} parent=0 // pred_check
    _
  $region11: #{_forward_impl.1} parent=0 // pred_check_branch
    %15 = sbr.rel (0) target = $region13
  $region12: #{_forward_impl.1} parent=0 // pred_region
    _
  $region13: #{_forward_impl.1} parent=0 // pred_fallthru
    _
  // Predicated region
  $region14: #{_forward_impl.1} parent=0 // pred_check
    _
  $region15: #{_forward_impl.1} parent=0 // pred_check_branch
    %17 = sbr.rel (0) target = $region17
  $region16: #{_forward_impl.1} parent=0 // pred_region
    _
  $region17: #{_forward_impl.1} parent=0 // pred_fallthru
    _
  // Predicated region
  $region18: #{_forward_impl.1} parent=0 // pred_check
    _
  $region19: #{_forward_impl.1} parent=0 // pred_check_branch
    %19 = sbr.rel (0) target = $region21
  $region20: #{_forward_impl.1} parent=0 // pred_region
    _
  $region21: #{_forward_impl.1} parent=0 // pred_fallthru
    _
  %v21 = vld [vmem:[%s0] sm:$0xf]
  %v22 = vld [vmem:[%s0 + $0x4] sm:$0xf]
  %v23 = vld [vmem:[%s0 + $0x8] sm:$0xf]
  %v24 = vld [vmem:[%s0 + $0xc] sm:$0xf]
  %v25 = vld [vmem:[%s0 + $0x10] sm:$0xf]
  %v26 = vld [vmem:[%s0 + $0x14] sm:$0xf]
  %v27 = vld [vmem:[%s0 + $0x18] sm:$0xf]
  %v28 = vld [vmem:[%s0 + $0x1c] sm:$0xf]
  %v29 = vld [vmem:[%s0 + $0x20] sm:$0xf]
  %v30 = vld [vmem:[%s0 + $0x24] sm:$0xf]
  %v31 = vld [vmem:[%s0 + $0x28] sm:$0xf]
  %v32 = vld [vmem:[%s0 + $0x2c] sm:$0xf]
  %v33 = vld [vmem:[%s0 + $0x30] sm:$0xf]
  %v34 = vld [vmem:[%s0 + $0x34] sm:$0xf]
  %v35 = vld [vmem:[%s0 + $0x38] sm:$0xf]
  %v36 = vld [vmem:[%s0 + $0x3c] sm:$0xf]
  %v37 = vld [vmem:[%s0 + $0x40] sm:$0xf]
  %v38 = vld [vmem:[%s0 + $0x44] sm:$0xf]
  %v39 = vld [vmem:[%s0 + $0x48] sm:$0xf]
  %v40 = vld [vmem:[%s0 + $0x4c] sm:$0xf]
  %v41 = vld [vmem:[%s0 + $0x50] sm:$0xf]
  %v42 = vld [vmem:[%s0 + $0x54] sm:$0xf]
  %v43 = vld [vmem:[%s0 + $0x58] sm:$0xf]
  %v44 = vld [vmem:[%s0 + $0x5c] sm:$0xf]
  %v45 = vld [vmem:[%s0 + $0x60] sm:$0xf]
  %v46 = vld [vmem:[%s0 + $0x64] sm:$0xf]
  %v47 = vld [vmem:[%s0 + $0x68] sm:$0xf]
  %v48 = vld [vmem:[%s0 + $0x6c] sm:$0xf]
  %v49 = vld [vmem:[%s0 + $0x70] sm:$0xf]
  %v50 = vld [vmem:[%s0 + $0x74] sm:$0xf]
  %v51 = vld [vmem:[%s0 + $0x78] sm:$0xf]
  %v52 = vld [vmem:[%s0 + $0x7c] sm:$0xf]
  %v53 = vld [vmem:[%s1] sm:$0xf]
  %v54 = vld [vmem:[%s1 + $0x4] sm:$0xf]
  %v55 = vld [vmem:[%s2] sm:$0x1]
  %v57 = vlaneseq
  %v58 = vshrl.u32 %v57, 7
  %v59 = vsub.s32 0, %v58
  %v60 = vrot.slane %v55, %v59
  %v94 = vunpack.c.l.b16 %v21
  %v95 = vunpack.c.l.b16 %v22
  %v96 = vunpack.c.l.b16 %v23
  %v97 = vunpack.c.l.b16 %v24
  %v98 = vunpack.c.l.b16 %v25
  %v99 = vunpack.c.l.b16 %v26
  %v100 = vunpack.c.l.b16 %v27
  %v101 = vunpack.c.l.b16 %v28
  %v102 = vunpack.c.l.b16 %v29
  %v103 = vunpack.c.l.b16 %v30
  %v104 = vunpack.c.l.b16 %v31
  %v105 = vunpack.c.l.b16 %v32
  %v106 = vunpack.c.l.b16 %v33
  %v107 = vunpack.c.l.b16 %v34
  %v108 = vunpack.c.l.b16 %v35
  %v109 = vunpack.c.l.b16 %v36
  %v110 = vunpack.c.l.b16 %v37
  %v111 = vunpack.c.l.b16 %v38
  %v112 = vunpack.c.l.b16 %v39
  %v113 = vunpack.c.l.b16 %v40
  %v114 = vunpack.c.l.b16 %v41
  %v115 = vunpack.c.l.b16 %v42
  %v116 = vunpack.c.l.b16 %v43
  %v117 = vunpack.c.l.b16 %v44
  %v118 = vunpack.c.l.b16 %v45
  %v119 = vunpack.c.l.b16 %v46
  %v120 = vunpack.c.l.b16 %v47
  %v121 = vunpack.c.l.b16 %v48
  %v122 = vunpack.c.l.b16 %v49
  %v123 = vunpack.c.l.b16 %v50
  %v124 = vunpack.c.l.b16 %v51
  %v125 = vunpack.c.l.b16 %v52
  %v126 = vpack.c.b16 %v95, %v94
  %v127 = vpack.c.b16 %v97, %v96
  %v128 = vpack.c.b16 %v99, %v98
  %v129 = vpack.c.b16 %v101, %v100
  %v130 = vpack.c.b16 %v103, %v102
  %v131 = vpack.c.b16 %v105, %v104
  %v132 = vpack.c.b16 %v107, %v106
  %v133 = vpack.c.b16 %v109, %v108
  %v134 = vpack.c.b16 %v111, %v110
  %v135 = vpack.c.b16 %v113, %v112
  %v136 = vpack.c.b16 %v115, %v114
  %v137 = vpack.c.b16 %v117, %v116
  %v138 = vpack.c.b16 %v119, %v118
  %v139 = vpack.c.b16 %v121, %v120
  %v140 = vpack.c.b16 %v123, %v122
  %v141 = vpack.c.b16 %v125, %v124
  %v144 = vunpack.c.l.b16 %v53
  %v145 = vunpack.c.l.b16 %v54
  %v146 = vpack.c.b16 %v145, %v144
  %vm148 = vcmask 130048
  %v150 = vsel %vm148, %v126, 0
  %v153 = vsel %vm148, %v127, 0
  %v156 = vsel %vm148, %v128, 0
  %v159 = vsel %vm148, %v129, 0
  %v162 = vsel %vm148, %v130, 0
  %v165 = vsel %vm148, %v131, 0
  %v168 = vsel %vm148, %v132, 0
  %v171 = vsel %vm148, %v133, 0
  %v174 = vsel %vm148, %v134, 0
  %v177 = vsel %vm148, %v135, 0
  %v180 = vsel %vm148, %v136, 0
  %v183 = vsel %vm148, %v137, 0
  %v186 = vsel %vm148, %v138, 0
  %v189 = vsel %vm148, %v139, 0
  %v192 = vsel %vm148, %v140, 0
  %v195 = vsel %vm148, %v141, 0
  %197 = vmatprep.subr.bf16.mxu0 0
  %198 = vmatpush1.bf16.msra.mxu0 0
  %199 = vmatprep.subr.bf16.mxu0 0
  %200 = vmatpush1.bf16.msra.mxu0 0
  %201 = vmatprep.subr.bf16.mxu0 0
  %202 = vmatpush1.bf16.msra.mxu0 0
  %203 = vmatprep.subr.bf16.mxu0 0
  %204 = vmatpush1.bf16.msra.mxu0 0
  %205 = vmatprep.subr.bf16.mxu0 0
  %206 = vmatpush1.bf16.msra.mxu0 0
  %207 = vmatprep.subr.bf16.mxu0 0
  %208 = vmatpush1.bf16.msra.mxu0 0
  %209 = vmatprep.subr.bf16.mxu0 0
  %210 = vmatpush1.bf16.msra.mxu0 0
  %211 = vmatprep.subr.bf16.mxu0 0
  %212 = vmatpush1.bf16.msra.mxu0 %v146
  %213 = vmatprep.subr.bf16.mxu0 0
  %214 = vmatpush2.bf16.msra.mxu0 0
  %215 = vmatprep.subr.bf16.mxu0 0
  %216 = vmatpush2.bf16.msra.mxu0 0
  %217 = vmatprep.subr.bf16.mxu0 0
  %218 = vmatpush2.bf16.msra.mxu0 0
  %219 = vmatprep.subr.bf16.mxu0 0
  %220 = vmatpush2.bf16.msra.mxu0 0
  %221 = vmatprep.subr.bf16.mxu0 0
  %222 = vmatpush2.bf16.msra.mxu0 0
  %223 = vmatprep.subr.bf16.mxu0 0
  %224 = vmatpush2.bf16.msra.mxu0 0
  %225 = vmatprep.subr.bf16.mxu0 0
  %226 = vmatpush2.bf16.msra.mxu0 0
  %227 = vmatprep.subr.bf16.mxu0 0
  %228 = vmatpush2.bf16.msra.mxu0 0
  %229 = vmatprep.mubr.bf16.mxu0 0
  %230 = vmatmul.mubr.bf16.gmra.mxu0 %v150
  %v231 = vpop.f32.mrf.mxu0
  %v232 = vadd.f32 %v60, %v231
  %v233 = vpop.f32.mrf.mxu0
  %v234 = vpop.f32.mrf.mxu0
  %v235 = vadd.f32 %v60, %v234
  %v236 = vpop.f32.mrf.mxu0
  %237 = vmatprep.mubr.bf16.mxu0 0
  %238 = vmatmul.mubr.bf16.gmra.mxu0 %v153
  %v239 = vpop.f32.mrf.mxu0
  %v240 = vadd.f32 %v60, %v239
  %v241 = vpop.f32.mrf.mxu0
  %v242 = vpop.f32.mrf.mxu0
  %v243 = vadd.f32 %v60, %v242
  %v244 = vpop.f32.mrf.mxu0
  %245 = vmatprep.mubr.bf16.mxu0 0
  %246 = vmatmul.mubr.bf16.gmra.mxu0 %v156
  %v247 = vpop.f32.mrf.mxu0
  %v248 = vadd.f32 %v60, %v247
  %v249 = vpop.f32.mrf.mxu0
  %v250 = vpop.f32.mrf.mxu0
  %v251 = vadd.f32 %v60, %v250
  %v252 = vpop.f32.mrf.mxu0
  %253 = vmatprep.mubr.bf16.mxu0 0
  %254 = vmatmul.mubr.bf16.gmra.mxu0 %v159
  %v255 = vpop.f32.mrf.mxu0
  %v256 = vadd.f32 %v60, %v255
  %v257 = vpop.f32.mrf.mxu0
  %v258 = vpop.f32.mrf.mxu0
  %v259 = vadd.f32 %v60, %v258
  %v260 = vpop.f32.mrf.mxu0
  %261 = vmatprep.mubr.bf16.mxu0 0
  %262 = vmatmul.mubr.bf16.gmra.mxu0 %v162
  %v263 = vpop.f32.mrf.mxu0
  %v264 = vadd.f32 %v60, %v263
  %v265 = vpop.f32.mrf.mxu0
  %v266 = vpop.f32.mrf.mxu0
  %v267 = vadd.f32 %v60, %v266
  %v268 = vpop.f32.mrf.mxu0
  %269 = vmatprep.mubr.bf16.mxu0 0
  %270 = vmatmul.mubr.bf16.gmra.mxu0 %v165
  %v271 = vpop.f32.mrf.mxu0
  %v272 = vadd.f32 %v60, %v271
  %v273 = vpop.f32.mrf.mxu0
  %v274 = vpop.f32.mrf.mxu0
  %v275 = vadd.f32 %v60, %v274
  %v276 = vpop.f32.mrf.mxu0
  %277 = vmatprep.mubr.bf16.mxu0 0
  %278 = vmatmul.mubr.bf16.gmra.mxu0 %v168
  %v279 = vpop.f32.mrf.mxu0
  %v280 = vadd.f32 %v60, %v279
  %v281 = vpop.f32.mrf.mxu0
  %v282 = vpop.f32.mrf.mxu0
  %v283 = vadd.f32 %v60, %v282
  %v284 = vpop.f32.mrf.mxu0
  %285 = vmatprep.mubr.bf16.mxu0 0
  %286 = vmatmul.mubr.bf16.gmra.mxu0 %v171
  %v287 = vpop.f32.mrf.mxu0
  %v288 = vadd.f32 %v60, %v287
  %v289 = vpop.f32.mrf.mxu0
  %v290 = vpop.f32.mrf.mxu0
  %v291 = vadd.f32 %v60, %v290
  %v292 = vpop.f32.mrf.mxu0
  %293 = vmatprep.mubr.bf16.mxu0 0
  %294 = vmatmul.mubr.bf16.gmra.mxu0 %v174
  %v295 = vpop.f32.mrf.mxu0
  %v296 = vadd.f32 %v60, %v295
  %v297 = vpop.f32.mrf.mxu0
  %v298 = vpop.f32.mrf.mxu0
  %v299 = vadd.f32 %v60, %v298
  %v300 = vpop.f32.mrf.mxu0
  %301 = vmatprep.mubr.bf16.mxu0 0
  %302 = vmatmul.mubr.bf16.gmra.mxu0 %v177
  %v303 = vpop.f32.mrf.mxu0
  %v304 = vadd.f32 %v60, %v303
  %v305 = vpop.f32.mrf.mxu0
  %v306 = vpop.f32.mrf.mxu0
  %v307 = vadd.f32 %v60, %v306
  %v308 = vpop.f32.mrf.mxu0
  %309 = vmatprep.mubr.bf16.mxu0 0
  %310 = vmatmul.mubr.bf16.gmra.mxu0 %v180
  %v311 = vpop.f32.mrf.mxu0
  %v312 = vadd.f32 %v60, %v311
  %v313 = vpop.f32.mrf.mxu0
  %v314 = vpop.f32.mrf.mxu0
  %v315 = vadd.f32 %v60, %v314
  %v316 = vpop.f32.mrf.mxu0
  %317 = vmatprep.mubr.bf16.mxu0 0
  %318 = vmatmul.mubr.bf16.gmra.mxu0 %v183
  %v319 = vpop.f32.mrf.mxu0
  %v320 = vadd.f32 %v60, %v319
  %v321 = vpop.f32.mrf.mxu0
  %v322 = vpop.f32.mrf.mxu0
  %v323 = vadd.f32 %v60, %v322
  %v324 = vpop.f32.mrf.mxu0
  %325 = vmatprep.mubr.bf16.mxu0 0
  %326 = vmatmul.mubr.bf16.gmra.mxu0 %v186
  %v327 = vpop.f32.mrf.mxu0
  %v328 = vadd.f32 %v60, %v327
  %v329 = vpop.f32.mrf.mxu0
  %v330 = vpop.f32.mrf.mxu0
  %v331 = vadd.f32 %v60, %v330
  %v332 = vpop.f32.mrf.mxu0
  %333 = vmatprep.mubr.bf16.mxu0 0
  %334 = vmatmul.mubr.bf16.gmra.mxu0 %v189
  %v335 = vpop.f32.mrf.mxu0
  %v336 = vadd.f32 %v60, %v335
  %v337 = vpop.f32.mrf.mxu0
  %v338 = vpop.f32.mrf.mxu0
  %v339 = vadd.f32 %v60, %v338
  %v340 = vpop.f32.mrf.mxu0
  %341 = vmatprep.mubr.bf16.mxu0 0
  %342 = vmatmul.mubr.bf16.gmra.mxu0 %v192
  %v343 = vpop.f32.mrf.mxu0
  %v344 = vadd.f32 %v60, %v343
  %v345 = vpop.f32.mrf.mxu0
  %v346 = vpop.f32.mrf.mxu0
  %v347 = vadd.f32 %v60, %v346
  %v348 = vpop.f32.mrf.mxu0
  %349 = vmatprep.mubr.bf16.mxu0 0
  %350 = vmatmul.mubr.bf16.gmra.mxu0 %v195
  %v351 = vpop.f32.mrf.mxu0
  %v352 = vadd.f32 %v60, %v351
  %v353 = vpop.f32.mrf.mxu0
  %v354 = vpop.f32.mrf.mxu0
  %v355 = vadd.f32 %v60, %v354
  %v356 = vpop.f32.mrf.mxu0
  %357 = vdwg.mxu0
  %v358 = vmax.f32 %v232, 0.0
  %v359 = vmax.f32 %v235, 0.0
  %v360 = vmax.f32 %v240, 0.0
  %v361 = vmax.f32 %v243, 0.0
  %v362 = vmax.f32 %v248, 0.0
  %v363 = vmax.f32 %v251, 0.0
  %v364 = vmax.f32 %v256, 0.0
  %v365 = vmax.f32 %v259, 0.0
  %v366 = vmax.f32 %v264, 0.0
  %v367 = vmax.f32 %v267, 0.0
  %v368 = vmax.f32 %v272, 0.0
  %v369 = vmax.f32 %v275, 0.0
  %v370 = vmax.f32 %v280, 0.0
  %v371 = vmax.f32 %v283, 0.0
  %v372 = vmax.f32 %v288, 0.0
  %v373 = vmax.f32 %v291, 0.0
  %v374 = vmax.f32 %v296, 0.0
  %v375 = vmax.f32 %v299, 0.0
  %v376 = vmax.f32 %v304, 0.0
  %v377 = vmax.f32 %v307, 0.0
  %v378 = vmax.f32 %v312, 0.0
  %v379 = vmax.f32 %v315, 0.0
  %v380 = vmax.f32 %v320, 0.0
  %v381 = vmax.f32 %v323, 0.0
  %v382 = vmax.f32 %v328, 0.0
  %v383 = vmax.f32 %v331, 0.0
  %v384 = vmax.f32 %v336, 0.0
  %v385 = vmax.f32 %v339, 0.0
  %v386 = vmax.f32 %v344, 0.0
  %v387 = vmax.f32 %v347, 0.0
  %v388 = vmax.f32 %v352, 0.0
  %v389 = vmax.f32 %v355, 0.0
  %v390 = vpack.c.bf16 %v359, %v358
  %v391 = vpack.c.bf16 %v361, %v360
  %v392 = vpack.c.bf16 %v363, %v362
  %v393 = vpack.c.bf16 %v365, %v364
  %v394 = vpack.c.bf16 %v367, %v366
  %v395 = vpack.c.bf16 %v369, %v368
  %v396 = vpack.c.bf16 %v371, %v370
  %v397 = vpack.c.bf16 %v373, %v372
  %v398 = vpack.c.bf16 %v375, %v374
  %v399 = vpack.c.bf16 %v377, %v376
  %v400 = vpack.c.bf16 %v379, %v378
  %v401 = vpack.c.bf16 %v381, %v380
  %v402 = vpack.c.bf16 %v383, %v382
  %v403 = vpack.c.bf16 %v385, %v384
  %v404 = vpack.c.bf16 %v387, %v386
  %v405 = vpack.c.bf16 %v389, %v388
  %v406 = vld [vmem:[%s3] sm:$0xf]
  %v407 = vld [vmem:[%s3 + $0x4] sm:$0xf]
  %v408 = vld [vmem:[%s3 + $0x8] sm:$0xf]
  %v409 = vld [vmem:[%s3 + $0xc] sm:$0xf]
  %v410 = vld [vmem:[%s3 + $0x10] sm:$0xf]
  %v411 = vld [vmem:[%s3 + $0x14] sm:$0xf]
  %v412 = vld [vmem:[%s3 + $0x18] sm:$0xf]
  %v413 = vld [vmem:[%s3 + $0x1c] sm:$0xf]
  %v414 = vld [vmem:[%s3 + $0x20] sm:$0xf]
  %v415 = vld [vmem:[%s3 + $0x24] sm:$0xf]
  %v416 = vld [vmem:[%s3 + $0x28] sm:$0xf]
  %v417 = vld [vmem:[%s3 + $0x2c] sm:$0xf]
  %v418 = vld [vmem:[%s3 + $0x30] sm:$0xf]
  %v419 = vld [vmem:[%s3 + $0x34] sm:$0xf]
  %v420 = vld [vmem:[%s3 + $0x38] sm:$0xf]
  %v421 = vld [vmem:[%s3 + $0x3c] sm:$0xf]
  %v422 = vld [vmem:[%s4] sm:$0x1]
  %v424 = vlaneseq
  %v425 = vshrl.u32 %v424, 7
  %v426 = vsub.s32 0, %v425
  %v427 = vrot.slane %v422, %v426
  %v445 = vunpack.c.l.b16 %v406
  %v446 = vunpack.c.l.b16 %v407
  %v447 = vunpack.c.l.b16 %v408
  %v448 = vunpack.c.l.b16 %v409
  %v449 = vunpack.c.l.b16 %v410
  %v450 = vunpack.c.l.b16 %v411
  %v451 = vunpack.c.l.b16 %v412
  %v452 = vunpack.c.l.b16 %v413
  %v453 = vunpack.c.l.b16 %v414
  %v454 = vunpack.c.l.b16 %v415
  %v455 = vunpack.c.l.b16 %v416
  %v456 = vunpack.c.l.b16 %v417
  %v457 = vunpack.c.l.b16 %v418
  %v458 = vunpack.c.l.b16 %v419
  %v459 = vunpack.c.l.b16 %v420
  %v460 = vunpack.c.l.b16 %v421
  %v461 = vpack.c.b16 %v446, %v445
  %v462 = vpack.c.b16 %v448, %v447
  %v463 = vpack.c.b16 %v450, %v449
  %v464 = vpack.c.b16 %v452, %v451
  %v465 = vpack.c.b16 %v454, %v453
  %v466 = vpack.c.b16 %v456, %v455
  %v467 = vpack.c.b16 %v458, %v457
  %v468 = vpack.c.b16 %v460, %v459
  %477 = vmatprep.subr.bf16.mxu0 0
  %478 = vmatpush1.bf16.msra.mxu0 %v468
  %479 = vmatprep.subr.bf16.mxu0 0
  %480 = vmatpush1.bf16.msra.mxu0 %v467
  %481 = vmatprep.subr.bf16.mxu0 0
  %482 = vmatpush1.bf16.msra.mxu0 %v466
  %483 = vmatprep.subr.bf16.mxu0 0
  %484 = vmatpush1.bf16.msra.mxu0 %v465
  %485 = vmatprep.subr.bf16.mxu0 0
  %486 = vmatpush1.bf16.msra.mxu0 %v464
  %487 = vmatprep.subr.bf16.mxu0 0
  %488 = vmatpush1.bf16.msra.mxu0 %v463
  %489 = vmatprep.subr.bf16.mxu0 0
  %490 = vmatpush1.bf16.msra.mxu0 %v462
  %491 = vmatprep.subr.bf16.mxu0 0
  %492 = vmatpush1.bf16.msra.mxu0 %v461
  %493 = vmatprep.subr.bf16.mxu0 0
  %494 = vmatpush2.bf16.msra.mxu0 0
  %495 = vmatprep.subr.bf16.mxu0 0
  %496 = vmatpush2.bf16.msra.mxu0 0
  %497 = vmatprep.subr.bf16.mxu0 0
  %498 = vmatpush2.bf16.msra.mxu0 0
  %499 = vmatprep.subr.bf16.mxu0 0
  %500 = vmatpush2.bf16.msra.mxu0 0
  %501 = vmatprep.subr.bf16.mxu0 0
  %502 = vmatpush2.bf16.msra.mxu0 0
  %503 = vmatprep.subr.bf16.mxu0 0
  %504 = vmatpush2.bf16.msra.mxu0 0
  %505 = vmatprep.subr.bf16.mxu0 0
  %506 = vmatpush2.bf16.msra.mxu0 0
  %507 = vmatprep.subr.bf16.mxu0 0
  %508 = vmatpush2.bf16.msra.mxu0 0
  %509 = vmatprep.mubr.bf16.mxu0 0
  %510 = vmatmul.mubr.bf16.gmra.mxu0 %v390
  %v511 = vpop.f32.mrf.mxu0
  %v512 = vadd.f32 %v427, %v511
  %v513 = vpop.f32.mrf.mxu0
  %v514 = vpop.f32.mrf.mxu0
  %v515 = vadd.f32 %v427, %v514
  %v516 = vpop.f32.mrf.mxu0
  %517 = vmatprep.mubr.bf16.mxu0 0
  %518 = vmatmul.mubr.bf16.gmra.mxu0 %v391
  %v519 = vpop.f32.mrf.mxu0
  %v520 = vadd.f32 %v427, %v519
  %v521 = vpop.f32.mrf.mxu0
  %v522 = vpop.f32.mrf.mxu0
  %v523 = vadd.f32 %v427, %v522
  %v524 = vpop.f32.mrf.mxu0
  %525 = vmatprep.mubr.bf16.mxu0 0
  %526 = vmatmul.mubr.bf16.gmra.mxu0 %v392
  %v527 = vpop.f32.mrf.mxu0
  %v528 = vadd.f32 %v427, %v527
  %v529 = vpop.f32.mrf.mxu0
  %v530 = vpop.f32.mrf.mxu0
  %v531 = vadd.f32 %v427, %v530
  %v532 = vpop.f32.mrf.mxu0
  %533 = vmatprep.mubr.bf16.mxu0 0
  %534 = vmatmul.mubr.bf16.gmra.mxu0 %v393
  %v535 = vpop.f32.mrf.mxu0
  %v536 = vadd.f32 %v427, %v535
  %v537 = vpop.f32.mrf.mxu0
  %v538 = vpop.f32.mrf.mxu0
  %v539 = vadd.f32 %v427, %v538
  %v540 = vpop.f32.mrf.mxu0
  %541 = vmatprep.mubr.bf16.mxu0 0
  %542 = vmatmul.mubr.bf16.gmra.mxu0 %v394
  %v543 = vpop.f32.mrf.mxu0
  %v544 = vadd.f32 %v427, %v543
  %v545 = vpop.f32.mrf.mxu0
  %v546 = vpop.f32.mrf.mxu0
  %v547 = vadd.f32 %v427, %v546
  %v548 = vpop.f32.mrf.mxu0
  %549 = vmatprep.mubr.bf16.mxu0 0
  %550 = vmatmul.mubr.bf16.gmra.mxu0 %v395
  %v551 = vpop.f32.mrf.mxu0
  %v552 = vadd.f32 %v427, %v551
  %v553 = vpop.f32.mrf.mxu0
  %v554 = vpop.f32.mrf.mxu0
  %v555 = vadd.f32 %v427, %v554
  %v556 = vpop.f32.mrf.mxu0
  %557 = vmatprep.mubr.bf16.mxu0 0
  %558 = vmatmul.mubr.bf16.gmra.mxu0 %v396
  %v559 = vpop.f32.mrf.mxu0
  %v560 = vadd.f32 %v427, %v559
  %v561 = vpop.f32.mrf.mxu0
  %v562 = vpop.f32.mrf.mxu0
  %v563 = vadd.f32 %v427, %v562
  %v564 = vpop.f32.mrf.mxu0
  %565 = vmatprep.mubr.bf16.mxu0 0
  %566 = vmatmul.mubr.bf16.gmra.mxu0 %v397
  %v567 = vpop.f32.mrf.mxu0
  %v568 = vadd.f32 %v427, %v567
  %v569 = vpop.f32.mrf.mxu0
  %v570 = vpop.f32.mrf.mxu0
  %v571 = vadd.f32 %v427, %v570
  %v572 = vpop.f32.mrf.mxu0
  %573 = vmatprep.mubr.bf16.mxu0 0
  %574 = vmatmul.mubr.bf16.gmra.mxu0 %v398
  %v575 = vpop.f32.mrf.mxu0
  %v576 = vadd.f32 %v427, %v575
  %v577 = vpop.f32.mrf.mxu0
  %v578 = vpop.f32.mrf.mxu0
  %v579 = vadd.f32 %v427, %v578
  %v580 = vpop.f32.mrf.mxu0
  %581 = vmatprep.mubr.bf16.mxu0 0
  %582 = vmatmul.mubr.bf16.gmra.mxu0 %v399
  %v583 = vpop.f32.mrf.mxu0
  %v584 = vadd.f32 %v427, %v583
  %v585 = vpop.f32.mrf.mxu0
  %v586 = vpop.f32.mrf.mxu0
  %v587 = vadd.f32 %v427, %v586
  %v588 = vpop.f32.mrf.mxu0
  %589 = vmatprep.mubr.bf16.mxu0 0
  %590 = vmatmul.mubr.bf16.gmra.mxu0 %v400
  %v591 = vpop.f32.mrf.mxu0
  %v592 = vadd.f32 %v427, %v591
  %v593 = vpop.f32.mrf.mxu0
  %v594 = vpop.f32.mrf.mxu0
  %v595 = vadd.f32 %v427, %v594
  %v596 = vpop.f32.mrf.mxu0
  %597 = vmatprep.mubr.bf16.mxu0 0
  %598 = vmatmul.mubr.bf16.gmra.mxu0 %v401
  %v599 = vpop.f32.mrf.mxu0
  %v600 = vadd.f32 %v427, %v599
  %v601 = vpop.f32.mrf.mxu0
  %v602 = vpop.f32.mrf.mxu0
  %v603 = vadd.f32 %v427, %v602
  %v604 = vpop.f32.mrf.mxu0
  %605 = vmatprep.mubr.bf16.mxu0 0
  %606 = vmatmul.mubr.bf16.gmra.mxu0 %v402
  %v607 = vpop.f32.mrf.mxu0
  %v608 = vadd.f32 %v427, %v607
  %v609 = vpop.f32.mrf.mxu0
  %v610 = vpop.f32.mrf.mxu0
  %v611 = vadd.f32 %v427, %v610
  %v612 = vpop.f32.mrf.mxu0
  %613 = vmatprep.mubr.bf16.mxu0 0
  %614 = vmatmul.mubr.bf16.gmra.mxu0 %v403
  %v615 = vpop.f32.mrf.mxu0
  %v616 = vadd.f32 %v427, %v615
  %v617 = vpop.f32.mrf.mxu0
  %v618 = vpop.f32.mrf.mxu0
  %v619 = vadd.f32 %v427, %v618
  %v620 = vpop.f32.mrf.mxu0
  %621 = vmatprep.mubr.bf16.mxu0 0
  %622 = vmatmul.mubr.bf16.gmra.mxu0 %v404
  %v623 = vpop.f32.mrf.mxu0
  %v624 = vadd.f32 %v427, %v623
  %v625 = vpop.f32.mrf.mxu0
  %v626 = vpop.f32.mrf.mxu0
  %v627 = vadd.f32 %v427, %v626
  %v628 = vpop.f32.mrf.mxu0
  %629 = vmatprep.mubr.bf16.mxu0 0
  %630 = vmatmul.mubr.bf16.gmra.mxu0 %v405
  %v631 = vpop.f32.mrf.mxu0
  %v632 = vadd.f32 %v427, %v631
  %v633 = vpop.f32.mrf.mxu0
  %v634 = vpop.f32.mrf.mxu0
  %v635 = vadd.f32 %v427, %v634
  %v636 = vpop.f32.mrf.mxu0
  %637 = vdwg.mxu0
  %638 = vmax.xlane.f32.xlu0 %v512
  %v639 = vpop.xlane.xlu0 %638
  %640 = vmax.xlane.f32.xlu0 %v515
  %v641 = vpop.xlane.xlu0 %640
  %642 = vmax.xlane.f32.xlu0 %v520
  %v643 = vpop.xlane.xlu0 %642
  %644 = vmax.xlane.f32.xlu0 %v523
  %v645 = vpop.xlane.xlu0 %644
  %646 = vmax.xlane.f32.xlu0 %v528
  %v647 = vpop.xlane.xlu0 %646
  %648 = vmax.xlane.f32.xlu0 %v531
  %v649 = vpop.xlane.xlu0 %648
  %650 = vmax.xlane.f32.xlu0 %v536
  %v651 = vpop.xlane.xlu0 %650
  %652 = vmax.xlane.f32.xlu0 %v539
  %v653 = vpop.xlane.xlu0 %652
  %654 = vmax.xlane.f32.xlu0 %v544
  %v655 = vpop.xlane.xlu0 %654
  %656 = vmax.xlane.f32.xlu0 %v547
  %v657 = vpop.xlane.xlu0 %656
  %658 = vmax.xlane.f32.xlu0 %v552
  %v659 = vpop.xlane.xlu0 %658
  %660 = vmax.xlane.f32.xlu0 %v555
  %v661 = vpop.xlane.xlu0 %660
  %662 = vmax.xlane.f32.xlu0 %v560
  %v663 = vpop.xlane.xlu0 %662
  %664 = vmax.xlane.f32.xlu0 %v563
  %v665 = vpop.xlane.xlu0 %664
  %666 = vmax.xlane.f32.xlu0 %v568
  %v667 = vpop.xlane.xlu0 %666
  %668 = vmax.xlane.f32.xlu0 %v571
  %v669 = vpop.xlane.xlu0 %668
  %670 = vmax.xlane.f32.xlu0 %v576
  %v671 = vpop.xlane.xlu0 %670
  %672 = vmax.xlane.f32.xlu0 %v579
  %v673 = vpop.xlane.xlu0 %672
  %674 = vmax.xlane.f32.xlu0 %v584
  %v675 = vpop.xlane.xlu0 %674
  %676 = vmax.xlane.f32.xlu0 %v587
  %v677 = vpop.xlane.xlu0 %676
  %678 = vmax.xlane.f32.xlu0 %v592
  %v679 = vpop.xlane.xlu0 %678
  %680 = vmax.xlane.f32.xlu0 %v595
  %v681 = vpop.xlane.xlu0 %680
  %682 = vmax.xlane.f32.xlu0 %v600
  %v683 = vpop.xlane.xlu0 %682
  %684 = vmax.xlane.f32.xlu0 %v603
  %v685 = vpop.xlane.xlu0 %684
  %686 = vmax.xlane.f32.xlu0 %v608
  %v687 = vpop.xlane.xlu0 %686
  %688 = vmax.xlane.f32.xlu0 %v611
  %v689 = vpop.xlane.xlu0 %688
  %690 = vmax.xlane.f32.xlu0 %v616
  %v691 = vpop.xlane.xlu0 %690
  %692 = vmax.xlane.f32.xlu0 %v619
  %v693 = vpop.xlane.xlu0 %692
  %694 = vmax.xlane.f32.xlu0 %v624
  %v695 = vpop.xlane.xlu0 %694
  %696 = vmax.xlane.f32.xlu0 %v627
  %v697 = vpop.xlane.xlu0 %696
  %698 = vmax.xlane.f32.xlu0 %v632
  %v699 = vpop.xlane.xlu0 %698
  %700 = vmax.xlane.f32.xlu0 %v635
  %v701 = vpop.xlane.xlu0 %700
  %v702 = vsub.f32 %v512, %v639
  %v703 = vsub.f32 %v515, %v641
  %v704 = vsub.f32 %v520, %v643
  %v705 = vsub.f32 %v523, %v645
  %v706 = vsub.f32 %v528, %v647
  %v707 = vsub.f32 %v531, %v649
  %v708 = vsub.f32 %v536, %v651
  %v709 = vsub.f32 %v539, %v653
  %v710 = vsub.f32 %v544, %v655
  %v711 = vsub.f32 %v547, %v657
  %v712 = vsub.f32 %v552, %v659
  %v713 = vsub.f32 %v555, %v661
  %v714 = vsub.f32 %v560, %v663
  %v715 = vsub.f32 %v563, %v665
  %v716 = vsub.f32 %v568, %v667
  %v717 = vsub.f32 %v571, %v669
  %v718 = vsub.f32 %v576, %v671
  %v719 = vsub.f32 %v579, %v673
  %v720 = vsub.f32 %v584, %v675
  %v721 = vsub.f32 %v587, %v677
  %v722 = vsub.f32 %v592, %v679
  %v723 = vsub.f32 %v595, %v681
  %v724 = vsub.f32 %v600, %v683
  %v725 = vsub.f32 %v603, %v685
  %v726 = vsub.f32 %v608, %v687
  %v727 = vsub.f32 %v611, %v689
  %v728 = vsub.f32 %v616, %v691
  %v729 = vsub.f32 %v619, %v693
  %v730 = vsub.f32 %v624, %v695
  %v731 = vsub.f32 %v627, %v697
  %v732 = vsub.f32 %v632, %v699
  %v733 = vsub.f32 %v635, %v701
  %v734 = vmul.f32 %v702, 1.442695
  %v735 = vpow.pop %v734
  %v736 = vmul.f32 %v703, 1.442695
  %v737 = vpow.pop %v736
  %v738 = vmul.f32 %v704, 1.442695
  %v739 = vpow.pop %v738
  %v740 = vmul.f32 %v705, 1.442695
  %v741 = vpow.pop %v740
  %v742 = vmul.f32 %v706, 1.442695
  %v743 = vpow.pop %v742
  %v744 = vmul.f32 %v707, 1.442695
  %v745 = vpow.pop %v744
  %v746 = vmul.f32 %v708, 1.442695
  %v747 = vpow.pop %v746
  %v748 = vmul.f32 %v709, 1.442695
  %v749 = vpow.pop %v748
  %v750 = vmul.f32 %v710, 1.442695
  %v751 = vpow.pop %v750
  %v752 = vmul.f32 %v711, 1.442695
  %v753 = vpow.pop %v752
  %v754 = vmul.f32 %v712, 1.442695
  %v755 = vpow.pop %v754
  %v756 = vmul.f32 %v713, 1.442695
  %v757 = vpow.pop %v756
  %v758 = vmul.f32 %v714, 1.442695
  %v759 = vpow.pop %v758
  %v760 = vmul.f32 %v715, 1.442695
  %v761 = vpow.pop %v760
  %v762 = vmul.f32 %v716, 1.442695
  %v763 = vpow.pop %v762
  %v764 = vmul.f32 %v717, 1.442695
  %v765 = vpow.pop %v764
  %v766 = vmul.f32 %v718, 1.442695
  %v767 = vpow.pop %v766
  %v768 = vmul.f32 %v719, 1.442695
  %v769 = vpow.pop %v768
  %v770 = vmul.f32 %v720, 1.442695
  %v771 = vpow.pop %v770
  %v772 = vmul.f32 %v721, 1.442695
  %v773 = vpow.pop %v772
  %v774 = vmul.f32 %v722, 1.442695
  %v775 = vpow.pop %v774
  %v776 = vmul.f32 %v723, 1.442695
  %v777 = vpow.pop %v776
  %v778 = vmul.f32 %v724, 1.442695
  %v779 = vpow.pop %v778
  %v780 = vmul.f32 %v725, 1.442695
  %v781 = vpow.pop %v780
  %v782 = vmul.f32 %v726, 1.442695
  %v783 = vpow.pop %v782
  %v784 = vmul.f32 %v727, 1.442695
  %v785 = vpow.pop %v784
  %v786 = vmul.f32 %v728, 1.442695
  %v787 = vpow.pop %v786
  %v788 = vmul.f32 %v729, 1.442695
  %v789 = vpow.pop %v788
  %v790 = vmul.f32 %v730, 1.442695
  %v791 = vpow.pop %v790
  %v792 = vmul.f32 %v731, 1.442695
  %v793 = vpow.pop %v792
  %v794 = vmul.f32 %v732, 1.442695
  %v795 = vpow.pop %v794
  %v796 = vmul.f32 %v733, 1.442695
  %v797 = vpow.pop %v796
  %798 = vadd.xlane.f32.xlu0 %v735
  %v799 = vpop.xlane.xlu0 %798
  %800 = vadd.xlane.f32.xlu0 %v737
  %v801 = vpop.xlane.xlu0 %800
  %802 = vadd.xlane.f32.xlu0 %v739
  %v803 = vpop.xlane.xlu0 %802
  %804 = vadd.xlane.f32.xlu0 %v741
  %v805 = vpop.xlane.xlu0 %804
  %806 = vadd.xlane.f32.xlu0 %v743
  %v807 = vpop.xlane.xlu0 %806
  %808 = vadd.xlane.f32.xlu0 %v745
  %v809 = vpop.xlane.xlu0 %808
  %810 = vadd.xlane.f32.xlu0 %v747
  %v811 = vpop.xlane.xlu0 %810
  %812 = vadd.xlane.f32.xlu0 %v749
  %v813 = vpop.xlane.xlu0 %812
  %814 = vadd.xlane.f32.xlu0 %v751
  %v815 = vpop.xlane.xlu0 %814
  %816 = vadd.xlane.f32.xlu0 %v753
  %v817 = vpop.xlane.xlu0 %816
  %818 = vadd.xlane.f32.xlu0 %v755
  %v819 = vpop.xlane.xlu0 %818
  %820 = vadd.xlane.f32.xlu0 %v757
  %v821 = vpop.xlane.xlu0 %820
  %822 = vadd.xlane.f32.xlu0 %v759
  %v823 = vpop.xlane.xlu0 %822
  %824 = vadd.xlane.f32.xlu0 %v761
  %v825 = vpop.xlane.xlu0 %824
  %826 = vadd.xlane.f32.xlu0 %v763
  %v827 = vpop.xlane.xlu0 %826
  %828 = vadd.xlane.f32.xlu0 %v765
  %v829 = vpop.xlane.xlu0 %828
  %830 = vadd.xlane.f32.xlu0 %v767
  %v831 = vpop.xlane.xlu0 %830
  %832 = vadd.xlane.f32.xlu0 %v769
  %v833 = vpop.xlane.xlu0 %832
  %834 = vadd.xlane.f32.xlu0 %v771
  %v835 = vpop.xlane.xlu0 %834
  %836 = vadd.xlane.f32.xlu0 %v773
  %v837 = vpop.xlane.xlu0 %836
  %838 = vadd.xlane.f32.xlu0 %v775
  %v839 = vpop.xlane.xlu0 %838
  %840 = vadd.xlane.f32.xlu0 %v777
  %v841 = vpop.xlane.xlu0 %840
  %842 = vadd.xlane.f32.xlu0 %v779
  %v843 = vpop.xlane.xlu0 %842
  %844 = vadd.xlane.f32.xlu0 %v781
  %v845 = vpop.xlane.xlu0 %844
  %846 = vadd.xlane.f32.xlu0 %v783
  %v847 = vpop.xlane.xlu0 %846
  %848 = vadd.xlane.f32.xlu0 %v785
  %v849 = vpop.xlane.xlu0 %848
  %850 = vadd.xlane.f32.xlu0 %v787
  %v851 = vpop.xlane.xlu0 %850
  %852 = vadd.xlane.f32.xlu0 %v789
  %v853 = vpop.xlane.xlu0 %852
  %854 = vadd.xlane.f32.xlu0 %v791
  %v855 = vpop.xlane.xlu0 %854
  %856 = vadd.xlane.f32.xlu0 %v793
  %v857 = vpop.xlane.xlu0 %856
  %858 = vadd.xlane.f32.xlu0 %v795
  %v859 = vpop.xlane.xlu0 %858
  %860 = vadd.xlane.f32.xlu0 %v797
  %v861 = vpop.xlane.xlu0 %860
  %v862 = vrcp.pop %v799
  %v863 = vmul.f32 %v735, %v862
  %v864 = vrcp.pop %v801
  %v865 = vmul.f32 %v737, %v864
  %v866 = vrcp.pop %v803
  %v867 = vmul.f32 %v739, %v866
  %v868 = vrcp.pop %v805
  %v869 = vmul.f32 %v741, %v868
  %v870 = vrcp.pop %v807
  %v871 = vmul.f32 %v743, %v870
  %v872 = vrcp.pop %v809
  %v873 = vmul.f32 %v745, %v872
  %v874 = vrcp.pop %v811
  %v875 = vmul.f32 %v747, %v874
  %v876 = vrcp.pop %v813
  %v877 = vmul.f32 %v749, %v876
  %v878 = vrcp.pop %v815
  %v879 = vmul.f32 %v751, %v878
  %v880 = vrcp.pop %v817
  %v881 = vmul.f32 %v753, %v880
  %v882 = vrcp.pop %v819
  %v883 = vmul.f32 %v755, %v882
  %v884 = vrcp.pop %v821
  %v885 = vmul.f32 %v757, %v884
  %v886 = vrcp.pop %v823
  %v887 = vmul.f32 %v759, %v886
  %v888 = vrcp.pop %v825
  %v889 = vmul.f32 %v761, %v888
  %v890 = vrcp.pop %v827
  %v891 = vmul.f32 %v763, %v890
  %v892 = vrcp.pop %v829
  %v893 = vmul.f32 %v765, %v892
  %v894 = vrcp.pop %v831
  %v895 = vmul.f32 %v767, %v894
  %v896 = vrcp.pop %v833
  %v897 = vmul.f32 %v769, %v896
  %v898 = vrcp.pop %v835
  %v899 = vmul.f32 %v771, %v898
  %v900 = vrcp.pop %v837
  %v901 = vmul.f32 %v773, %v900
  %v902 = vrcp.pop %v839
  %v903 = vmul.f32 %v775, %v902
  %v904 = vrcp.pop %v841
  %v905 = vmul.f32 %v777, %v904
  %v906 = vrcp.pop %v843
  %v907 = vmul.f32 %v779, %v906
  %v908 = vrcp.pop %v845
  %v909 = vmul.f32 %v781, %v908
  %v910 = vrcp.pop %v847
  %v911 = vmul.f32 %v783, %v910
  %v912 = vrcp.pop %v849
  %v913 = vmul.f32 %v785, %v912
  %v914 = vrcp.pop %v851
  %v915 = vmul.f32 %v787, %v914
  %v916 = vrcp.pop %v853
  %v917 = vmul.f32 %v789, %v916
  %v918 = vrcp.pop %v855
  %v919 = vmul.f32 %v791, %v918
  %v920 = vrcp.pop %v857
  %v921 = vmul.f32 %v793, %v920
  %v922 = vrcp.pop %v859
  %v923 = vmul.f32 %v795, %v922
  %v924 = vrcp.pop %v861
  %v925 = vmul.f32 %v797, %v924
  %926 = vst [vmem:[%s5] sm:$0xff] %v863
  %927 = vst [vmem:[%s5 + $0x8] sm:$0xff] %v865
  %928 = vst [vmem:[%s5 + $0x10] sm:$0xff] %v867
  %929 = vst [vmem:[%s5 + $0x18] sm:$0xff] %v869
  %930 = vst [vmem:[%s5 + $0x20] sm:$0xff] %v871
  %931 = vst [vmem:[%s5 + $0x28] sm:$0xff] %v873
  %932 = vst [vmem:[%s5 + $0x30] sm:$0xff] %v875
  %933 = vst [vmem:[%s5 + $0x38] sm:$0xff] %v877
  %934 = vst [vmem:[%s5 + $0x40] sm:$0xff] %v879
  %935 = vst [vmem:[%s5 + $0x48] sm:$0xff] %v881
  %936 = vst [vmem:[%s5 + $0x50] sm:$0xff] %v883
  %937 = vst [vmem:[%s5 + $0x58] sm:$0xff] %v885
  %938 = vst [vmem:[%s5 + $0x60] sm:$0xff] %v887
  %939 = vst [vmem:[%s5 + $0x68] sm:$0xff] %v889
  %940 = vst [vmem:[%s5 + $0x70] sm:$0xff] %v891
  %941 = vst [vmem:[%s5 + $0x78] sm:$0xff] %v893
  %942 = vst [vmem:[%s5 + $0x80] sm:$0xff] %v895
  %943 = vst [vmem:[%s5 + $0x88] sm:$0xff] %v897
  %944 = vst [vmem:[%s5 + $0x90] sm:$0xff] %v899
  %945 = vst [vmem:[%s5 + $0x98] sm:$0xff] %v901
  %946 = vst [vmem:[%s5 + $0xa0] sm:$0xff] %v903
  %947 = vst [vmem:[%s5 + $0xa8] sm:$0xff] %v905
  %948 = vst [vmem:[%s5 + $0xb0] sm:$0xff] %v907
  %949 = vst [vmem:[%s5 + $0xb8] sm:$0xff] %v909
  %950 = vst [vmem:[%s5 + $0xc0] sm:$0xff] %v911
  %951 = vst [vmem:[%s5 + $0xc8] sm:$0xff] %v913
  %952 = vst [vmem:[%s5 + $0xd0] sm:$0xff] %v915
  %953 = vst [vmem:[%s5 + $0xd8] sm:$0xff] %v917
  %954 = vst [vmem:[%s5 + $0xe0] sm:$0xff] %v919
  %955 = vst [vmem:[%s5 + $0xe8] sm:$0xff] %v921
  %956 = vst [vmem:[%s5 + $0xf0] sm:$0xff] %v923
  %957 = vst [vmem:[%s5 + $0xf8] sm:$0xff] %v925
  // Predicated region
  $region22: #{_forward_impl.1} parent=0 // pred_check
    _
  $region23: #{_forward_impl.1} parent=0 // pred_check_branch
    %959 = sbr.rel (0) target = $region25
  $region24: #{_forward_impl.1} parent=0 // pred_region
    _
  $region25: #{_forward_impl.1} parent=0 // pred_fallthru
    _
  // Predicated region
  $region26: #{_forward_impl.1} parent=0 // pred_check
    _
  $region27: #{_forward_impl.1} parent=0 // pred_check_branch
    %961 = sbr.rel (0) target = $region29
  $region28: #{_forward_impl.1} parent=0 // pred_region
    _
  $region29: #{_forward_impl.1} parent=0 // pred_fallthru
    _

</llo_original>
